<compile_context>
chip_gen: v7x
topology: tpu7x:2x2x1
jax: 0.10.0
libtpu: 0.0.40
codegen_flags: <defaults>
</compile_context>

<pallas_src>
import jax
import jax.numpy as jnp
from jax.experimental import pallas as pl
from jax.experimental.pallas import tpu as pltpu

_LANE = 128


def _round_up(x, m):
    return ((x + m - 1) // m) * m


# ----------------------------------------------------------------------------
# Pallas kernels
# ----------------------------------------------------------------------------
def _make_fused_update_norm_kernel(emit_raw):
    """raw  = where(mask, 0.5*relu(agg@Wa + ba) + 0.5*(emb@We + be), emb)
       norm = raw / max(||raw||_2, 1e-12)   (row-wise)
    Emits (raw, norm) when emit_raw, else only norm (the entity update never
    reads its raw table again, so we skip that output's HBM store traffic)."""
    def kernel(agg_ref, emb_ref, mask_ref, wa_ref, ba_ref, we_ref, be_ref,
               *out_refs):
        agg = agg_ref[...].astype(jnp.float32)       # [tm, H]
        emb = emb_ref[...].astype(jnp.float32)       # [tm, H]
        mask = mask_ref[...]                         # [tm, 1]
        a = jnp.dot(agg, wa_ref[...],
                    preferred_element_type=jnp.float32) + ba_ref[...]
        e = jnp.dot(emb, we_ref[...],
                    preferred_element_type=jnp.float32) + be_ref[...]
        upd = 0.5 * jnp.maximum(a, 0.0) + 0.5 * e
        raw = jnp.where(mask > 0.0, upd, emb)
        if emit_raw:
            out_refs[0][...] = raw.astype(out_refs[0].dtype)
        norm_ref = out_refs[-1]
        # F.normalize(p=2, dim=1, eps=1e-12) == x * rsqrt(max(sum(x^2), eps^2))
        sumsq = jnp.sum(raw * raw, axis=-1, keepdims=True)
        norm_ref[...] = (raw * jax.lax.rsqrt(jnp.maximum(sumsq, 1e-24))
                         ).astype(norm_ref.dtype)
    return kernel


def _normalize_kernel(x_ref, out_ref):
    """Row-wise L2 normalize (used once, for the initial F.normalize)."""
    x = x_ref[...].astype(jnp.float32)
    sumsq = jnp.sum(x * x, axis=-1, keepdims=True)
    out_ref[...] = (x * jax.lax.rsqrt(jnp.maximum(sumsq, 1e-24))
                    ).astype(out_ref.dtype)


# ----------------------------------------------------------------------------
# Tile / VMEM sizing (generation-aware: works within v5e/v6e 128 MiB and
# v7x 64 MiB-per-TC budgets while amortizing the ~0.35us/step overhead).
# ----------------------------------------------------------------------------
def _footprint_bytes(tm, h, n_out, itemsize):
    # double-buffered streamed blocks (agg + emb + mask + outputs) + weights
    # and biases (f32, default double-buffered even with constant index_map).
    stream = 2 * itemsize * (tm * h * (2 + n_out) + tm)
    weights = 2 * 4 * 2 * (h * h + h)
    return stream + weights


def _choose_tile(n_rows, h, n_out, itemsize,
                 vmem_budget=24 * 1024 * 1024, min_steps=2):
    """Largest row tile that (a) still yields >= 2 grid steps so both v7x
    TensorCores get work on the 'parallel' axis and (b) keeps the
    double-buffered footprint under a budget that fits every generation."""
    for tm in (2048, 1024, 512, 256, 128, 64, 32, 16, 8):
        if pl.cdiv(n_rows, tm) < min_steps:
            continue
        if _footprint_bytes(tm, h, n_out, itemsize) <= vmem_budget:
            return tm
    return 8


def _vmem_limit(tm, h, n_out, itemsize):
    need = _footprint_bytes(tm, h, n_out, itemsize)
    return int(min(56 * 1024 * 1024, max(32 * 1024 * 1024, 2 * need)))


# ----------------------------------------------------------------------------
# pallas_call wrappers
# ----------------------------------------------------------------------------
def fused_update_norm(agg, emb, mask, wa_t, ba, we_t, be, tm, emit_raw):
    N, H = emb.shape
    assert N % tm == 0 and H % _LANE == 0
    dtype = emb.dtype
    n_out = 2 if emit_raw else 1
    row_spec = pl.BlockSpec((tm, H), lambda i: (i, 0))
    if emit_raw:
        out_shape = (jax.ShapeDtypeStruct((N, H), dtype),
                     jax.ShapeDtypeStruct((N, H), dtype))
        out_specs = (row_spec, row_spec)
    else:
        out_shape = jax.ShapeDtypeStruct((N, H), dtype)
        out_specs = row_spec
    # TODO(synk): on v7x, Wa/We/ba/be could be single-buffered
    # (pipeline_mode=pl.Buffered(1)) to reclaim VMEM for larger H; kept at the
    # portable default here.
    return pl.pallas_call(
        _make_fused_update_norm_kernel(emit_raw),
        out_shape=out_shape,
        grid_spec=pltpu.PrefetchScalarGridSpec(
            num_scalar_prefetch=0,
            grid=(N // tm,),
            in_specs=[
                row_spec,                                   # agg (scatter-mean)
                row_spec,                                   # current embeddings
                pl.BlockSpec((tm, 1), lambda i: (i, 0)),    # row mask
                pl.BlockSpec((H, H), lambda i: (0, 0)),     # Wa^T (VMEM resident)
                pl.BlockSpec((1, H), lambda i: (0, 0)),     # ba
                pl.BlockSpec((H, H), lambda i: (0, 0)),     # We^T (VMEM resident)
                pl.BlockSpec((1, H), lambda i: (0, 0)),     # be
            ],
            out_specs=out_specs,
        ),
        compiler_params=pltpu.CompilerParams(
            dimension_semantics=("parallel",),
            vmem_limit_bytes=_vmem_limit(tm, H, n_out,
                                         jnp.dtype(dtype).itemsize)),
    )(agg, emb, mask, wa_t, ba, we_t, be)


def l2_normalize(x, tm):
    N, H = x.shape
    assert N % tm == 0 and H % _LANE == 0
    return pl.pallas_call(
        _normalize_kernel,
        out_shape=jax.ShapeDtypeStruct((N, H), x.dtype),
        grid_spec=pltpu.PrefetchScalarGridSpec(
            num_scalar_prefetch=0,
            grid=(N // tm,),
            in_specs=[pl.BlockSpec((tm, H), lambda i: (i, 0))],
            out_specs=pl.BlockSpec((tm, H), lambda i: (i, 0)),
        ),
        compiler_params=pltpu.CompilerParams(
            dimension_semantics=("parallel",),
            vmem_limit_bytes=_vmem_limit(tm, H, 1,
                                         jnp.dtype(x.dtype).itemsize)),
    )(x)


# ----------------------------------------------------------------------------
# Glue (gathers / scatter-mean / layer loop) in plain JAX
# ----------------------------------------------------------------------------
def segment_mean(values, seg_ids, num_segments):
    v = values.astype(jnp.float32)
    sums = jnp.zeros((num_segments, v.shape[1]), jnp.float32).at[seg_ids].add(v)
    counts = jnp.zeros((num_segments,), jnp.float32).at[seg_ids].add(1.0)
    return sums / jnp.maximum(counts, 1.0)[:, None]


def _pad2d(x, rows, cols):
    r, c = x.shape
    if r == rows and c == cols:
        return x
    return jnp.pad(x, ((0, rows - r), (0, cols - c)))


def hnn_forward(params, ent_emb, rel_emb, index, num_ents, num_rels, layers,
                table_dtype=jnp.float32):
    H = ent_emb.shape[1]
    Hp = _round_up(max(H, _LANE), _LANE)          # lane-dense hidden dim
    itemsize = jnp.dtype(table_dtype).itemsize
    idx_u = index[0].astype(jnp.int32)
    idx_r = index[1].astype(jnp.int32)
    num_r2 = num_rels * 2

    # Row tiles + zero-padding to tile multiples. Pad rows/cols have mask 0
    # (pass-through), zero weights columns, and normalize(0)=0, so they never
    # affect real rows/columns; we slice them off at the end.
    tm_u = _choose_tile(num_ents, Hp, 1, itemsize)   # entity kernel: norm only
    tm_r = _choose_tile(num_r2, Hp, 2, itemsize)     # relation kernel: raw+norm
    ne_pad = pl.cdiv(num_ents, tm_u) * tm_u
    nr_pad = pl.cdiv(num_r2, tm_r) * tm_r

    ent = _pad2d(ent_emb.astype(jnp.float32), ne_pad, Hp).astype(table_dtype)
    rel = _pad2d(rel_emb.astype(jnp.float32), nr_pad, Hp).astype(table_dtype)

    wa_r = _pad2d(params["w_u2r_wt"], Hp, Hp)
    ba_r = _pad2d(params["w_u2r_b"], 1, Hp)
    we_r = _pad2d(params["w_r_wt"], Hp, Hp)
    be_r = _pad2d(params["w_r_b"], 1, Hp)
    wa_u = _pad2d(params["w_r2u_wt"], Hp, Hp)
    ba_u = _pad2d(params["w_r2u_b"], 1, Hp)
    we_u = _pad2d(params["w_u_wt"], Hp, Hp)
    be_u = _pad2d(params["w_u_b"], 1, Hp)

    # Boolean row masks == torch.unique() update positions.
    u_mask = jnp.zeros((ne_pad, 1), jnp.float32).at[idx_u].set(1.0)
    r_mask = jnp.zeros((nr_pad, 1), jnp.float32).at[idx_r].set(1.0)

    g_h_last = l2_normalize(ent, tm_u)
    g_h_0_last = l2_normalize(rel, tm_r)

    for _ in range(layers):
        g_h = g_h_last
        g_h_0 = g_h_0_last

        # ---- relation update: u -> r (raw needed for the r2u gather) ----
        u2r = segment_mean(g_h[idx_u], idx_r, nr_pad).astype(table_dtype)
        g_h_0_raw, g_h_0_norm = fused_update_norm(
            u2r, g_h_0, r_mask, wa_r, ba_r, we_r, be_r, tm_r, emit_raw=True)

        # ---- entity update: r -> u (raw output never read -> not emitted) ----
        r2u = segment_mean(g_h_0_raw[idx_r], idx_u, ne_pad).astype(table_dtype)
        g_h_norm = fused_update_norm(
            r2u, g_h, u_mask, wa_u, ba_u, we_u, be_u, tm_u, emit_raw=False)

        g_h_last = g_h_norm
        g_h_0_last = g_h_0_norm

    return g_h_last[:num_ents, :H].astype(jnp.float32)


# ----------------------------------------------------------------------------
# Deterministic parameter init (nn.Linear-style uniform(-1/sqrt(H), 1/sqrt(H)))
# ----------------------------------------------------------------------------
def init_params(key, hidden_dim):
    scale = 1.0 / (hidden_dim ** 0.5)
    names = ["w_r", "w_u2r", "w_u", "w_r2u"]   # u_dp is defined but unused
    params = {}
    keys = jax.random.split(key, 2 * len(names))
    for i, n in enumerate(names):
        w = jax.random.uniform(keys[2 * i], (hidden_dim, hidden_dim),
                               jnp.float32, -scale, scale)
        b = jax.random.uniform(keys[2 * i + 1], (1, hidden_dim),
                               jnp.float32, -scale, scale)
        params[n + "_wt"] = w.T   # pre-transposed so kernel does x @ Wt + b
        params[n + "_b"] = b
    return params


# ----------------------------------------------------------------------------
# Pure-JAX reference (mirrors the PyTorch forward) for a sanity check
# ----------------------------------------------------------------------------
def hnn_forward_ref(params, ent_emb, rel_emb, index, num_ents, num_rels, layers):
    def normalize(x):
        n = jnp.sqrt(jnp.sum(x * x, axis=1, keepdims=True))
        return x / jnp.maximum(n, 1e-12)

    idx_u = index[0].astype(jnp.int32)
    idx_r = index[1].astype(jnp.int32)
    u_mask = jnp.zeros((num_ents, 1), jnp.float32).at[idx_u].set(1.0)
    r_mask = jnp.zeros((num_rels * 2, 1), jnp.float32).at[idx_r].set(1.0)

    g_h = normalize(ent_emb)
    g_h_0 = normalize(rel_emb)
    for _ in range(layers):
        u2r = segment_mean(g_h[idx_u], idx_r, num_rels * 2)
        upd_r = (0.5 * jax.nn.relu(u2r @ params["w_u2r_wt"] + params["w_u2r_b"])
                 + 0.5 * (g_h_0 @ params["w_r_wt"] + params["w_r_b"]))
        g_h_0_new = jnp.where(r_mask > 0.0, upd_r, g_h_0)

        r2u = segment_mean(g_h_0_new[idx_r], idx_u, num_ents)
        upd_u = (0.5 * jax.nn.relu(r2u @ params["w_r2u_wt"] + params["w_r2u_b"])
                 + 0.5 * (g_h @ params["w_u_wt"] + params["w_u_b"]))
        g_h_new = jnp.where(u_mask > 0.0, upd_u, g_h)

        g_h = normalize(g_h_new)
        g_h_0 = normalize(g_h_0_new)
    return g_h


if __name__ == "__main__":
    key = jax.random.PRNGKey(0)
    configs = [
        # (num_ents, num_rels, hidden_dim, num_edges, layers)
        (32, 8, 32, 64, 2),        # module-implied small shapes
        (200, 12, 96, 512, 2),     # exercises row/lane padding + multi-step grid
    ]
    for cfg_i, (num_ents, num_rels, hidden_dim, num_edges, layers) in enumerate(configs):
        k = jax.random.fold_in(key, cfg_i)
        k_ent, k_rel, k_u, k_r, k_par = jax.random.split(k, 5)
        ent_emb = jax.random.normal(k_ent, (num_ents, hidden_dim), jnp.float32)
        rel_emb = jax.random.normal(k_rel, (num_rels * 2, hidden_dim), jnp.float32)
        idx_u = jax.random.randint(k_u, (num_edges,), 0, num_ents)
        idx_r = jax.random.randint(k_r, (num_edges,), 0, num_rels * 2)
        index = jnp.stack([idx_u, idx_r], axis=0)      # == index_list[0]
        params = init_params(k_par, hidden_dim)

        out = jax.block_until_ready(hnn_forward(
            params, ent_emb, rel_emb, index, num_ents, num_rels, layers))
        assert out.shape == (num_ents, hidden_dim)
        assert bool(jnp.all(jnp.isfinite(out)))

        ref = jax.block_until_ready(hnn_forward_ref(
            params, ent_emb, rel_emb, index, num_ents, num_rels, layers))
        max_diff = float(jnp.max(jnp.abs(out - ref)))
        assert max_diff < 1e-2, f"cfg {cfg_i}: mismatch vs reference: {max_diff}"

    # bf16 table-storage flag (HBM-traffic halving path): smoke test only.
    num_ents, num_rels, hidden_dim, num_edges, layers = configs[0]
    out_bf16 = jax.block_until_ready(hnn_forward(
        params, ent_emb[:num_ents, :hidden_dim] if False else
        jax.random.normal(jax.random.PRNGKey(1), (num_ents, hidden_dim), jnp.float32),
        jax.random.normal(jax.random.PRNGKey(2), (num_rels * 2, hidden_dim), jnp.float32),
        jnp.stack([jax.random.randint(jax.random.PRNGKey(3), (num_edges,), 0, num_ents),
                   jax.random.randint(jax.random.PRNGKey(4), (num_edges,), 0, num_rels * 2)]),
        num_ents, num_rels, layers, table_dtype=jnp.bfloat16))
    assert out_bf16.shape == (num_ents, hidden_dim)
    assert bool(jnp.all(jnp.isfinite(out_bf16)))

    print("KERNEL_OK")
</pallas_src>

<mosaic_0001>
module attributes {stable_mosaic.version = 11 : i64} {
  func.func @_normalize_kernel(%arg0: i32, %arg1: memref<16x128xf32, #tpu.memory_space<vmem>>, %arg2: memref<16x128xf32, #tpu.memory_space<vmem>>) attributes {dimension_semantics = [#tpu.dimension_semantics<parallel>], iteration_bounds = array<i64: 2>, scalar_prefetch = 0 : i64, scratch_operands = 0 : i64, tpu.core_type = #tpu.core_type<tc>, window_params = [{transform_indices = @transform_0, window_bounds = array<i64: 16, 128>}, {transform_indices = @transform_1, window_bounds = array<i64: 16, 128>}]} {
    %c0 = arith.constant 0 : index
    %c0_0 = arith.constant 0 : index
    %0 = vector.load %arg1[%c0, %c0_0] : memref<16x128xf32, #tpu.memory_space<vmem>>, vector<16x128xf32>
    %1 = arith.mulf %0, %0 : vector<16x128xf32>
    %cst = arith.constant dense<0.000000e+00> : vector<16xf32>
    %2 = vector.multi_reduction <add>, %1, %cst [1] : vector<16x128xf32> to vector<16xf32>
    %3 = vector.shape_cast %2 : vector<16xf32> to vector<16x1xf32>
    %cst_1 = arith.constant 1.000000e-24 : f32
    %4 = vector.broadcast %cst_1 : f32 to vector<16x1xf32>
    %5 = arith.maximumf %3, %4 : vector<16x1xf32>
    %6 = math.rsqrt %5 : vector<16x1xf32>
    %7 = vector.broadcast %6 : vector<16x1xf32> to vector<16x128xf32>
    %8 = arith.mulf %0, %7 : vector<16x128xf32>
    %c0_2 = arith.constant 0 : index
    %c0_3 = arith.constant 0 : index
    %9 = vector.load %arg2[%c0_2, %c0_3] : memref<16x128xf32, #tpu.memory_space<vmem>>, vector<16x128xf32>
    tpu.vector_store %arg2[%c0_2, %c0_3], %8 {strides = array<i32>} : memref<16x128xf32, #tpu.memory_space<vmem>>, vector<16x128xf32>,
    return
  }
  func.func @transform_0(%arg0: i32) -> (i32, i32) {
    %c0_i32 = arith.constant 0 : i32
    %c0_i32_0 = arith.constant 0 : i32
    return %arg0, %c0_i32 : i32, i32
  }
  func.func @transform_1(%arg0: i32) -> (i32, i32) {
    %c0_i32 = arith.constant 0 : i32
    %c0_i32_0 = arith.constant 0 : i32
    return %arg0, %c0_i32 : i32, i32
  }
}

</mosaic_0001>

<llo_original>
// kernel: tpu_custom_call.1
$region0: #{tpu_custom_call.1}
  #allocation0 [shape = 'u32[]', space=smem, size = 0x4, offset = 0x4, fixed_abs, tag = 'smem constant byte address 0x4 - core index']
  #allocation1 [shape = 'u32[144,128]{1,0:T(1,128)}', space=vmem, size = 0x12000, scoped, tag = 'internal scratch']
  %s0 = inlined_call_operand.hbm [shape: f32[32,128], index: 0, kind: input, shape index: {}]
  %s1 = inlined_call_operand.hbm [shape: f32[32,128], index: 1, kind: output, shape index: {}]
  %s2 = sld [smem:[#allocation0]]
  $region41: #{tpu_custom_call.1} parent=0
    _
  %s4 = ssub.s32 1, %s2
  %s5 = scalar_select 0, %s4, %s2
  $region1: #{tpu_custom_call.1} parent=0
    #allocation2 [shape = 'u8[16384]{0}', space=vmem, size = 0x4000, scoped, tag = 'input window, operand 0']
    #allocation3 [shape = 's32[2]{0}', space=sflag, size = 0x8, scoped, tag = 'scoped memory for tpu_custom_call.1']
    #allocation4 [shape = 's32[2]{0}', space=sflag, size = 0x8, scoped, tag = 'scoped memory for tpu_custom_call.1']
    #allocation5 [shape = 'u8[16384]{0}', space=vmem, size = 0x4000, scoped, tag = 'output window, operand 0']
    %6 = vsyncpa [#allocation3], 0
    %s7 = scalar_lea.sflag [#allocation3], 1
    %8 = vsyncpa %s7, 0
    %9 = vsyncpa [#allocation4], 0
    %s10 = scalar_lea.sflag [#allocation4], 1
    %11 = vsyncpa %s10, 0
    loop: start=0, step=1, limit=4
    $region2: #{tpu_custom_call.1} parent=1 // loop_pre_header
      _
    $region3: #{tpu_custom_call.1} parent=1 // loop_header
      %s13 = sphi 0, %s17
      %p14 = scmp.ge.s32.totalorder %s13, 4
      %s23 = sphi 0, %s25
      %s26 = sphi 0, %s23
      %s27 = sphi 0, %s26
      %s43 = sphi 0, %s27
      %s49 = sphi 0, %s51
      %s52 = sphi 0, %s49
      %s53 = sphi 0, %s52
      %s69 = sphi 0, %s53
    $region4: #{tpu_custom_call.1} parent=1 // loop_header_branch
      %16 = sbr.rel (%p14) target = $region8
    $region5: #{tpu_custom_call.1} parent=1 // loop_body
      %s18 = ssub.s32 %s13, 1
      %s19 = ssub.s32 %s13, 2
      %s20 = sadd.s32 %s13, 1
      %s21 = ssub.s32 %s13, %s20
      %p22 = scmp.eq.s32.totalorder %s21, 0
      %s24 = sadd.s32 %s23, 1
      %s25 = scalar_select %p22, %s23, %s24
      %p28 = pneg %p22
      %p29 = scmp.eq.s32.totalorder %s13, 1
      %p30 = por %p28, %p29
      %p31 = scmp.ne.s32.totalorder %s23, %s26
      %p32 = scmp.eq.s32.totalorder %s13, 0
      %p33 = por %p31, %p32
      %p34 = scmp.ne.s32.totalorder %s23, %s26
      %p35 = scmp.eq.s32.totalorder %s18, 1
      %p36 = por %p34, %p35
      %p37 = scmp.ne.s32.totalorder %s26, %s27
      %p38 = scmp.eq.s32.totalorder %s18, 0
      %p39 = por %p37, %p38
      %p40 = scmp.ne.s32.totalorder %s26, %s27
      %p41 = scmp.eq.s32.totalorder %s19, 1
      %p42 = por %p40, %p41
      %p44 = scmp.ne.s32.totalorder %s27, %s43
      %p45 = scmp.eq.s32.totalorder %s19, 0
      %p46 = por %p44, %p45
      %s47 = ssub.s32 %s13, %s20
      %p48 = scmp.eq.s32.totalorder %s47, 0
      %s50 = sadd.s32 %s49, 1
      %s51 = scalar_select %p48, %s49, %s50
      %p54 = pneg %p48
      %p55 = scmp.eq.s32.totalorder %s13, 1
      %p56 = por %p54, %p55
      %p57 = scmp.ne.s32.totalorder %s49, %s52
      %p58 = scmp.eq.s32.totalorder %s13, 0
      %p59 = por %p57, %p58
      %p60 = scmp.ne.s32.totalorder %s49, %s52
      %p61 = scmp.eq.s32.totalorder %s18, 1
      %p62 = por %p60, %p61
      %p63 = scmp.ne.s32.totalorder %s52, %s53
      %p64 = scmp.eq.s32.totalorder %s18, 0
      %p65 = por %p63, %p64
      %p66 = scmp.ne.s32.totalorder %s52, %s53
      %p67 = scmp.eq.s32.totalorder %s19, 1
      %p68 = por %p66, %p67
      %p70 = scmp.ne.s32.totalorder %s53, %s69
      %p71 = scmp.eq.s32.totalorder %s19, 0
      %p72 = por %p70, %p71
      %p73 = scmp.le.s32.totalorder 1, %s13
      %p74 = scmp.lt.s32.totalorder %s13, 3
      %p75 = pnand %p73, %p74
      %p76 = pneg %p75
      // Predicated region
      $region9: #{tpu_custom_call.1} parent=5 // pred_check
        _
      $region10: #{tpu_custom_call.1} parent=5 // pred_check_branch
        %78 = sbr.rel (%p75) target = $region12
      $region11: #{tpu_custom_call.1} parent=5 // pred_region
        %s79 = ssub.s32 %s13, 1
      $region12: #{tpu_custom_call.1} parent=5 // pred_fallthru
        _
      %p80 = scmp.lt.s32.totalorder %s13, 2
      // Predicated region
      $region13: #{tpu_custom_call.1} parent=5 // pred_check
        %p81 = pneg %p80
      $region14: #{tpu_custom_call.1} parent=5 // pred_check_branch
        %83 = sbr.rel (%p81) target = $region16
      $region15: #{tpu_custom_call.1} parent=5 // pred_region
        // Predicated region
        $region17: #{tpu_custom_call.1} parent=15 // pred_check
          %p84 = pneg %p33
        $region18: #{tpu_custom_call.1} parent=15 // pred_check_branch
          %86 = sbr.rel (%p84) target = $region20
        $region19: #{tpu_custom_call.1} parent=15 // pred_region
          %s87 = sand.u32 %s23, 1
          %s88 = scalar_lea.sflag [#allocation3], %s87
          %s89 = sand.u32 %s23, 1
          %s90 = smul.addr %s89, 16
          %s91 = scalar_lea.vmem [#allocation2], %s90
          %s92 = smul.u32 2, %s13
          %s94 = ssub.s32 256, 256
          %95 = vsyncadd %s88, %s94
          %s96 = smul.addr %s92, 128
          %s97 = scalar_lea.hbm %s0, %s96
          %s98 = sshll.u32 %s91, 4
          %s99 = int_to_ptr.vmem [resolvable:$true] %s98
          %104 = dma.hbm_to_vmem [thread:$0]  %s97, 256, %s99, %s88, 128, 128, 8
        $region20: #{tpu_custom_call.1} parent=15 // pred_fallthru
          _
      $region16: #{tpu_custom_call.1} parent=5 // pred_fallthru
        _
      %p105 = scmp.le.s32.totalorder 1, %s13
      %p106 = scmp.lt.s32.totalorder %s13, 3
      %p107 = pnand %p105, %p106
      %p108 = pneg %p107
      // Predicated region
      $region21: #{tpu_custom_call.1} parent=5 // pred_check
        _
      $region22: #{tpu_custom_call.1} parent=5 // pred_check_branch
        %110 = sbr.rel (%p107) target = $region24
      $region23: #{tpu_custom_call.1} parent=5 // pred_region
        %s111 = ssub.s32 %s13, 1
        %s112 = sand.u32 %s26, 1
        %s113 = scalar_lea.sflag [#allocation3], %s112
        %s114 = sand.u32 %s26, 1
        %s115 = smul.addr %s114, 16
        %s116 = scalar_lea.vmem [#allocation2], %s115
        // Predicated region
        $region25: #{tpu_custom_call.1} parent=23 // pred_check
          %p117 = pneg %p39
        $region26: #{tpu_custom_call.1} parent=23 // pred_check_branch
          %119 = sbr.rel (%p117) target = $region28
        $region27: #{tpu_custom_call.1} parent=23 // pred_region
          %120 = dma.done %s113, 256
        $region28: #{tpu_custom_call.1} parent=23 // pred_fallthru
          _
        %s121 = sand.u32 %s26, 1
        %s122 = scalar_lea.sflag [#allocation3], %s121
        %s123 = sand.u32 %s26, 1
        %s124 = smul.addr %s123, 16
        %s125 = scalar_lea.vmem [#allocation2], %s124
        %p126 = pneg %p39
        %p127 = pneg %p36
        %p128 = pneg %p65
        %p129 = pneg %p62
        %s130 = sand.u32 %s52, 1
        %s131 = scalar_lea.sflag [#allocation4], %s130
        %s132 = sand.u32 %s52, 1
        %s133 = smul.addr %s132, 16
        %s134 = scalar_lea.vmem [#allocation5], %s133
        %s135 = smul.u32 2, %s18
        %s136 = smul.u32 2, %s18
        %v137 = vld [vmem:[%s116] sm:$0xff]
        %v138 = vld [vmem:[%s116 + $0x8] sm:$0xff]
        %v139 = vmul.f32 %v137, %v137
        %v140 = vmul.f32 %v138, %v138
        %141 = vadd.xlane.f32.xlu0 %v139
        %v142 = vpop.xlane.xlu0 %141
        %143 = vadd.xlane.f32.xlu0 %v140
        %v144 = vpop.xlane.xlu0 %143
        %v145 = vmax.f32 %v142, 1e-24
        %v146 = vmax.f32 %v144, 1e-24
        %v147 = vrsqrt.pop %v145
        %v148 = vrsqrt.pop %v146
        %v149 = vmul.f32 %v137, %v147
        %v150 = vmul.f32 %v138, %v148
        %151 = vst [vmem:[%s134] sm:$0xff] %v149
        %152 = vst [vmem:[%s134 + $0x8] sm:$0xff] %v150
        %s153 = sand.u32 %s52, 1
        %s154 = scalar_lea.sflag [#allocation4], %s153
        %s155 = sand.u32 %s52, 1
        %s156 = smul.addr %s155, 16
        %s157 = scalar_lea.vmem [#allocation5], %s156
        // Predicated region
        $region29: #{tpu_custom_call.1} parent=23 // pred_check
          %p158 = pneg %p62
        $region30: #{tpu_custom_call.1} parent=23 // pred_check_branch
          %160 = sbr.rel (%p158) target = $region32
        $region31: #{tpu_custom_call.1} parent=23 // pred_region
          %s161 = smul.u32 2, %s18
          %s163 = ssub.s32 256, 256
          %164 = vsyncadd %s154, %s163
          %s165 = smul.addr %s161, 128
          %s166 = scalar_lea.hbm %s1, %s165
          %s167 = sshll.u32 %s157, 4
          %s168 = int_to_ptr.vmem [resolvable:$true] %s167
          %173 = dma.vmem_to_hbm [thread:$0]  %s168, 256, %s166, %s154, 128, 128, 8
        $region32: #{tpu_custom_call.1} parent=23 // pred_fallthru
          _
      $region24: #{tpu_custom_call.1} parent=5 // pred_fallthru
        _
      %p174 = scmp.le.s32.totalorder 2, %s13
      // Predicated region
      $region33: #{tpu_custom_call.1} parent=5 // pred_check
        %p175 = pneg %p174
      $region34: #{tpu_custom_call.1} parent=5 // pred_check_branch
        %177 = sbr.rel (%p175) target = $region36
      $region35: #{tpu_custom_call.1} parent=5 // pred_region
        %s178 = ssub.s32 %s13, 2
        // Predicated region
        $region37: #{tpu_custom_call.1} parent=35 // pred_check
          %p179 = pneg %p68
        $region38: #{tpu_custom_call.1} parent=35 // pred_check_branch
          %181 = sbr.rel (%p179) target = $region40
        $region39: #{tpu_custom_call.1} parent=35 // pred_region
          %s182 = sand.u32 %s53, 1
          %s183 = scalar_lea.sflag [#allocation4], %s182
          %s184 = sand.u32 %s53, 1
          %s185 = smul.addr %s184, 16
          %s186 = scalar_lea.vmem [#allocation5], %s185
          %187 = dma.done %s183, 256
        $region40: #{tpu_custom_call.1} parent=35 // pred_fallthru
          _
      $region36: #{tpu_custom_call.1} parent=5 // pred_fallthru
        _
    $region6: #{tpu_custom_call.1} parent=1 // loop_footer
      %s17 = sadd.s32 1, %s13
    $region7: #{tpu_custom_call.1} parent=1 // loop_footer_branch
      %12 = sbr.rel target = $region3
    $region8: #{tpu_custom_call.1} parent=1 // loop_exit
      _
    %188 = vsyncpa [#allocation3], 1
    %s189 = scalar_lea.sflag [#allocation3], 1
    %190 = vsyncpa %s189, 1
    %191 = vsyncpa [#allocation4], 1
    %s192 = scalar_lea.sflag [#allocation4], 1
    %193 = vsyncpa %s192, 1

</llo_original>
